<compile_context>
chip_gen: v6e
topology: v6e:2x2x1
jax: 0.10.0
libtpu: 0.0.40
codegen_flags: <defaults>
</compile_context>

<pallas_src>
import functools

import jax
import jax.numpy as jnp
import numpy as np
from jax.experimental import pallas as pl
from jax.experimental.pallas import tpu as pltpu


def _query_kernel(feats_ref, attn_ref, w1_ref, b1_ref, w2_ref, b2_ref,
                  out_ref, im2col_ref, *, height, width, hw_pad):
    """Attention gating + two fused 3x3 conv + ReLU layers, lane-dense (C_pad, N*HW_pad).

    feats_ref / attn_ref / out_ref : (C_pad, N*HW_pad)  batch fused into lanes
    w*_ref                         : (C_pad, 9*C_pad)   col (ky*3+kx)*C_pad + ci
    b*_ref                         : (C_pad, 1)
    im2col_ref (VMEM scratch)      : (9*C_pad, N*HW_pad)
    """
    c_pad, total = feats_ref.shape
    h, w = height, width

    # Fused-lane index and per-image indices.  Built once, shared by every tap
    # and both convs (JAX does not CSE iotas, so do not rebuild per use).
    pidx = jax.lax.broadcasted_iota(jnp.int32, (1, total), 1)
    pin = (pidx & (hw_pad - 1)) if (hw_pad & (hw_pad - 1)) == 0 else (pidx % hw_pad)
    xidx = (pin & (w - 1)) if (w & (w - 1)) == 0 else (pin % w)

    def tap_mask(dy, dx):
        conds = []
        if dy == -1:
            conds.append(pin >= w)                   # needs y-1 >= 0
        elif dy == 1:
            conds.append(pin < (h - 1) * w)          # needs y+1 <= H-1
        if dx == -1:
            conds.append(xidx >= 1)                  # needs x-1 >= 0
        elif dx == 1:
            conds.append(xidx <= w - 2)              # needs x+1 <= W-1
        if not conds:
            return None
        m = conds[0]
        for c in conds[1:]:
            m = jnp.logical_and(m, c)
        return m

    # (lane shift, boundary mask) for the 9 taps in (ky, kx) row-major order.
    # Per-image masks also stop rolls from leaking data across image boundaries
    # (and across the padded spatial tail) on the fused lane axis.
    taps_meta = []
    for ky in range(3):
        for kx in range(3):
            dy, dx = ky - 1, kx - 1
            shift = (-(dy * w + dx)) % total         # tap[p] = x[p + dy*W + dx]
            taps_meta.append((shift, tap_mask(dy, dx)))

    def conv3x3_relu(x, w_mat, bias):
        # x: (C_pad, N*HW_pad).  Taps go to aligned scratch rows -> one big-K matmul.
        for k, (shift, mask) in enumerate(taps_meta):
            t = x if shift == 0 else pltpu.roll(x, shift, axis=1)   # XLU rotate
            if mask is not None:
                t = jnp.where(mask, t, 0.0)                          # zero padding
            im2col_ref[pl.ds(k * c_pad, c_pad), :] = t               # aligned store
        acc = jnp.dot(w_mat, im2col_ref[...],
                      preferred_element_type=jnp.float32)            # (C_pad, total)
        return jnp.maximum(acc + bias, 0.0)                          # bias+ReLU (VPU)

    w1 = w1_ref[...]
    w2 = w2_ref[...]
    b1 = b1_ref[...]
    b2 = b2_ref[...]

    attended = feats_ref[...] * attn_ref[...]        # attention gating, f32 VPU
    hidden = conv3x3_relu(attended, w1, b1)
    out = conv3x3_relu(hidden, w2, b2)
    out_ref[...] = out.astype(out_ref.dtype)         # full-vreg unmasked stores


@jax.jit
def query_module_forward(feats_nchw, attn_nchw, w1, b1, w2, b2):
    """feats: (N, C, H, W); attn: (N, Ca, H, W); w*: (C, C, 3, 3) torch OIHW; b*: (C,)."""
    n, c, h, w = feats_nchw.shape
    ca = attn_nchw.shape[1]
    hw = h * w
    hw_pad = ((hw + 127) // 128) * 128               # lane-dense spatial length
    c_pad = ((c + 7) // 8) * 8                       # sublane-aligned channels

    # PyTorch gating: attn repeated along channels to match feats (identity if equal).
    attn_full = attn_nchw if ca == c else jnp.tile(attn_nchw, (1, c // ca, 1, 1))

    def prep_x(x_nchw):
        x = x_nchw.reshape(n, c, hw).astype(jnp.float32)
        x = jnp.pad(x, ((0, 0), (0, c_pad - c), (0, hw_pad - hw)))
        # (N, C_pad, HW_pad) -> (C_pad, N*HW_pad): batch fused into the lane axis.
        return jnp.transpose(x, (1, 0, 2)).reshape(c_pad, n * hw_pad)

    feats_k = prep_x(feats_nchw)
    attn_k = prep_x(attn_full)

    # Tiny weight prep: OIHW -> (Cout_pad, (ky*3+kx)*Cin_pad + ci), zero-padded.
    def prep_w(wt):
        wf = jnp.transpose(wt, (0, 2, 3, 1)).astype(jnp.float32)     # (Co, kH, kW, Ci)
        wf = jnp.pad(wf, ((0, c_pad - c), (0, 0), (0, 0), (0, c_pad - c)))
        return wf.reshape(c_pad, 9 * c_pad)

    def prep_b(b):
        return jnp.pad(b.astype(jnp.float32), (0, c_pad - c)).reshape(c_pad, 1)

    w1_k, w2_k = prep_w(w1), prep_w(w2)
    b1_k, b2_k = prep_b(b1), prep_b(b2)

    total = n * hw_pad
    kernel = functools.partial(_query_kernel, height=h, width=w, hw_pad=hw_pad)
    out_flat = pl.pallas_call(
        kernel,
        out_shape=jax.ShapeDtypeStruct((c_pad, total), jnp.float32),
        grid_spec=pltpu.PrefetchScalarGridSpec(
            num_scalar_prefetch=0,
            grid=(1,),                               # whole (tiny) problem in one step
            in_specs=[
                pl.BlockSpec((c_pad, total), lambda i: (0, 0)),          # feats
                pl.BlockSpec((c_pad, total), lambda i: (0, 0)),          # attn
                pl.BlockSpec((c_pad, 9 * c_pad), lambda i: (0, 0)),      # w1
                pl.BlockSpec((c_pad, 1), lambda i: (0, 0)),              # b1
                pl.BlockSpec((c_pad, 9 * c_pad), lambda i: (0, 0)),      # w2
                pl.BlockSpec((c_pad, 1), lambda i: (0, 0)),              # b2
            ],
            out_specs=pl.BlockSpec((c_pad, total), lambda i: (0, 0)),
            scratch_shapes=[pltpu.VMEM((9 * c_pad, total), jnp.float32)],
        ),
        compiler_params=pltpu.CompilerParams(
            dimension_semantics=("arbitrary",)),
    )(feats_k, attn_k, w1_k, b1_k, w2_k, b2_k)

    # (C_pad, N*HW_pad) -> NCHW, dropping channel / spatial padding (pure XLA slice).
    out = out_flat.reshape(c_pad, n, hw_pad)[:c, :, :hw]
    return jnp.transpose(out, (1, 0, 2)).reshape(n, c, h, w)


def _reference_forward(feats, attn, w1, b1, w2, b2):
    """Pure-JAX reference of the PyTorch module (NCHW / OIHW)."""
    r = feats.shape[1] // attn.shape[1]
    attended = feats * jnp.tile(attn, (1, r, 1, 1))
    dn = ("NCHW", "OIHW", "NCHW")
    y = jax.lax.conv_general_dilated(attended, w1, (1, 1), "SAME",
                                     dimension_numbers=dn) + b1[None, :, None, None]
    y = jax.nn.relu(y)
    y = jax.lax.conv_general_dilated(y, w2, (1, 1), "SAME",
                                     dimension_numbers=dn) + b2[None, :, None, None]
    return jax.nn.relu(y)


if __name__ == "__main__":
    N, dim, H, W = 2, 4, 16, 16

    key = jax.random.PRNGKey(0)
    k_feats, k_attn, k_w1, k_b1, k_w2, k_b2 = jax.random.split(key, 6)

    feats = jax.random.normal(k_feats, (N, dim, H, W), dtype=jnp.float32)
    # attention map with a single channel (module repeats it across feature channels)
    attn = jax.nn.sigmoid(jax.random.normal(k_attn, (N, 1, H, W), dtype=jnp.float32))

    # Deterministic kaiming-normal-ish init (fan_in = dim*3*3), torch OIHW layout.
    fan_in = dim * 3 * 3
    std = (2.0 / fan_in) ** 0.5
    w1 = jax.random.normal(k_w1, (dim, dim, 3, 3), dtype=jnp.float32) * std
    w2 = jax.random.normal(k_w2, (dim, dim, 3, 3), dtype=jnp.float32) * std
    bound = 1.0 / (fan_in ** 0.5)
    b1 = jax.random.uniform(k_b1, (dim,), minval=-bound, maxval=bound, dtype=jnp.float32)
    b2 = jax.random.uniform(k_b2, (dim,), minval=-bound, maxval=bound, dtype=jnp.float32)

    out = query_module_forward(feats, attn, w1, b1, w2, b2)
    out = jax.block_until_ready(out)

    ref = _reference_forward(feats, attn, w1, b1, w2, b2)
    np.testing.assert_allclose(np.asarray(out), np.asarray(ref), rtol=1e-4, atol=1e-4)

    print("KERNEL_OK")
</pallas_src>

<mosaic_0001>
module attributes {stable_mosaic.version = 11 : i64} {
  func.func @_query_kernel(%arg0: i32, %arg1: memref<8x512xf32, #tpu.memory_space<vmem>>, %arg2: memref<8x512xf32, #tpu.memory_space<vmem>>, %arg3: memref<8x72xf32, #tpu.memory_space<vmem>>, %arg4: memref<8x1xf32, #tpu.memory_space<vmem>>, %arg5: memref<8x72xf32, #tpu.memory_space<vmem>>, %arg6: memref<8x1xf32, #tpu.memory_space<vmem>>, %arg7: memref<8x512xf32, #tpu.memory_space<vmem>>, %arg8: memref<72x512xf32, #tpu.memory_space<vmem>>) attributes {dimension_semantics = [#tpu.dimension_semantics<arbitrary>], iteration_bounds = array<i64: 1>, scalar_prefetch = 0 : i64, scratch_operands = 1 : i64, tpu.core_type = #tpu.core_type<tc>, window_params = [{pipeline_mode = #tpu.pipeline_mode<synchronous>, transform_indices = @transform_0, window_bounds = array<i64: 8, 512>}, {pipeline_mode = #tpu.pipeline_mode<synchronous>, transform_indices = @transform_1, window_bounds = array<i64: 8, 512>}, {pipeline_mode = #tpu.pipeline_mode<synchronous>, transform_indices = @transform_2, window_bounds = array<i64: 8, 72>}, {pipeline_mode = #tpu.pipeline_mode<synchronous>, transform_indices = @transform_3, window_bounds = array<i64: 8, 1>}, {pipeline_mode = #tpu.pipeline_mode<synchronous>, transform_indices = @transform_4, window_bounds = array<i64: 8, 72>}, {pipeline_mode = #tpu.pipeline_mode<synchronous>, transform_indices = @transform_5, window_bounds = array<i64: 8, 1>}, {pipeline_mode = #tpu.pipeline_mode<synchronous>, transform_indices = @transform_6, window_bounds = array<i64: 8, 512>}]} {
    %0 = tpu.iota {dimensions = array<i32: 1>} : vector<1x512xi32>
    %c255_i32 = arith.constant 255 : i32
    %1 = vector.broadcast %c255_i32 : i32 to vector<1x512xi32>
    %2 = arith.andi %0, %1 : vector<1x512xi32>
    %c15_i32 = arith.constant 15 : i32
    %3 = vector.broadcast %c15_i32 : i32 to vector<1x512xi32>
    %4 = arith.andi %2, %3 : vector<1x512xi32>
    %c16_i32 = arith.constant 16 : i32
    %5 = vector.broadcast %c16_i32 : i32 to vector<1x512xi32>
    %6 = arith.cmpi sge, %2, %5 : vector<1x512xi32>
    %c1_i32 = arith.constant 1 : i32
    %7 = vector.broadcast %c1_i32 : i32 to vector<1x512xi32>
    %8 = arith.cmpi sge, %4, %7 : vector<1x512xi32>
    %9 = arith.andi %6, %8 : vector<1x512xi1>
    %c16_i32_0 = arith.constant 16 : i32
    %10 = vector.broadcast %c16_i32_0 : i32 to vector<1x512xi32>
    %11 = arith.cmpi sge, %2, %10 : vector<1x512xi32>
    %c16_i32_1 = arith.constant 16 : i32
    %12 = vector.broadcast %c16_i32_1 : i32 to vector<1x512xi32>
    %13 = arith.cmpi sge, %2, %12 : vector<1x512xi32>
    %c14_i32 = arith.constant 14 : i32
    %14 = vector.broadcast %c14_i32 : i32 to vector<1x512xi32>
    %15 = arith.cmpi sle, %4, %14 : vector<1x512xi32>
    %16 = arith.andi %13, %15 : vector<1x512xi1>
    %c1_i32_2 = arith.constant 1 : i32
    %17 = vector.broadcast %c1_i32_2 : i32 to vector<1x512xi32>
    %18 = arith.cmpi sge, %4, %17 : vector<1x512xi32>
    %c14_i32_3 = arith.constant 14 : i32
    %19 = vector.broadcast %c14_i32_3 : i32 to vector<1x512xi32>
    %20 = arith.cmpi sle, %4, %19 : vector<1x512xi32>
    %c240_i32 = arith.constant 240 : i32
    %21 = vector.broadcast %c240_i32 : i32 to vector<1x512xi32>
    %22 = arith.cmpi slt, %2, %21 : vector<1x512xi32>
    %c1_i32_4 = arith.constant 1 : i32
    %23 = vector.broadcast %c1_i32_4 : i32 to vector<1x512xi32>
    %24 = arith.cmpi sge, %4, %23 : vector<1x512xi32>
    %25 = arith.andi %22, %24 : vector<1x512xi1>
    %c240_i32_5 = arith.constant 240 : i32
    %26 = vector.broadcast %c240_i32_5 : i32 to vector<1x512xi32>
    %27 = arith.cmpi slt, %2, %26 : vector<1x512xi32>
    %c240_i32_6 = arith.constant 240 : i32
    %28 = vector.broadcast %c240_i32_6 : i32 to vector<1x512xi32>
    %29 = arith.cmpi slt, %2, %28 : vector<1x512xi32>
    %c14_i32_7 = arith.constant 14 : i32
    %30 = vector.broadcast %c14_i32_7 : i32 to vector<1x512xi32>
    %31 = arith.cmpi sle, %4, %30 : vector<1x512xi32>
    %32 = arith.andi %29, %31 : vector<1x512xi1>
    %c0 = arith.constant 0 : index
    %c0_8 = arith.constant 0 : index
    %33 = vector.load %arg3[%c0, %c0_8] : memref<8x72xf32, #tpu.memory_space<vmem>>, vector<8x72xf32>
    %c0_9 = arith.constant 0 : index
    %c0_10 = arith.constant 0 : index
    %34 = vector.load %arg5[%c0_9, %c0_10] : memref<8x72xf32, #tpu.memory_space<vmem>>, vector<8x72xf32>
    %c0_11 = arith.constant 0 : index
    %c0_12 = arith.constant 0 : index
    %35 = vector.load %arg4[%c0_11, %c0_12] : memref<8x1xf32, #tpu.memory_space<vmem>>, vector<8x1xf32>
    %c0_13 = arith.constant 0 : index
    %c0_14 = arith.constant 0 : index
    %36 = vector.load %arg6[%c0_13, %c0_14] : memref<8x1xf32, #tpu.memory_space<vmem>>, vector<8x1xf32>
    %c0_15 = arith.constant 0 : index
    %c0_16 = arith.constant 0 : index
    %37 = vector.load %arg1[%c0_15, %c0_16] : memref<8x512xf32, #tpu.memory_space<vmem>>, vector<8x512xf32>
    %c0_17 = arith.constant 0 : index
    %c0_18 = arith.constant 0 : index
    %38 = vector.load %arg2[%c0_17, %c0_18] : memref<8x512xf32, #tpu.memory_space<vmem>>, vector<8x512xf32>
    %39 = arith.mulf %37, %38 : vector<8x512xf32>
    %c17_i32 = arith.constant 17 : i32
    %40 = tpu.dynamic_rotate %39 by %c17_i32 dim 1 : vector<8x512xf32>, i32 -> vector<8x512xf32>
    %cst = arith.constant 0.000000e+00 : f32
    %41 = vector.shape_cast %9 : vector<1x512xi1> to vector<1x512xi1>
    %42 = vector.broadcast %41 : vector<1x512xi1> to vector<8x512xi1>
    %43 = vector.broadcast %cst : f32 to vector<8x512xf32>
    %44 = arith.select %42, %40, %43 : vector<8x512xi1>, vector<8x512xf32>
    %c0_19 = arith.constant 0 : index
    %c0_20 = arith.constant 0 : index
    %45 = vector.load %arg8[%c0_19, %c0_20] : memref<72x512xf32, #tpu.memory_space<vmem>>, vector<8x512xf32>
    tpu.vector_store %arg8[%c0_19, %c0_20], %44 {strides = array<i32>} : memref<72x512xf32, #tpu.memory_space<vmem>>, vector<8x512xf32>,
    %c16_i32_21 = arith.constant 16 : i32
    %46 = tpu.dynamic_rotate %39 by %c16_i32_21 dim 1 : vector<8x512xf32>, i32 -> vector<8x512xf32>
    %cst_22 = arith.constant 0.000000e+00 : f32
    %47 = vector.shape_cast %11 : vector<1x512xi1> to vector<1x512xi1>
    %48 = vector.broadcast %47 : vector<1x512xi1> to vector<8x512xi1>
    %49 = vector.broadcast %cst_22 : f32 to vector<8x512xf32>
    %50 = arith.select %48, %46, %49 : vector<8x512xi1>, vector<8x512xf32>
    %c8 = arith.constant 8 : index
    %c0_23 = arith.constant 0 : index
    %51 = vector.load %arg8[%c8, %c0_23] : memref<72x512xf32, #tpu.memory_space<vmem>>, vector<8x512xf32>
    tpu.vector_store %arg8[%c8, %c0_23], %50 {strides = array<i32>} : memref<72x512xf32, #tpu.memory_space<vmem>>, vector<8x512xf32>,
    %c15_i32_24 = arith.constant 15 : i32
    %52 = tpu.dynamic_rotate %39 by %c15_i32_24 dim 1 : vector<8x512xf32>, i32 -> vector<8x512xf32>
    %cst_25 = arith.constant 0.000000e+00 : f32
    %53 = vector.shape_cast %16 : vector<1x512xi1> to vector<1x512xi1>
    %54 = vector.broadcast %53 : vector<1x512xi1> to vector<8x512xi1>
    %55 = vector.broadcast %cst_25 : f32 to vector<8x512xf32>
    %56 = arith.select %54, %52, %55 : vector<8x512xi1>, vector<8x512xf32>
    %c16 = arith.constant 16 : index
    %c0_26 = arith.constant 0 : index
    %57 = vector.load %arg8[%c16, %c0_26] : memref<72x512xf32, #tpu.memory_space<vmem>>, vector<8x512xf32>
    tpu.vector_store %arg8[%c16, %c0_26], %56 {strides = array<i32>} : memref<72x512xf32, #tpu.memory_space<vmem>>, vector<8x512xf32>,
    %c1_i32_27 = arith.constant 1 : i32
    %58 = tpu.dynamic_rotate %39 by %c1_i32_27 dim 1 : vector<8x512xf32>, i32 -> vector<8x512xf32>
    %cst_28 = arith.constant 0.000000e+00 : f32
    %59 = vector.shape_cast %18 : vector<1x512xi1> to vector<1x512xi1>
    %60 = vector.broadcast %59 : vector<1x512xi1> to vector<8x512xi1>
    %61 = vector.broadcast %cst_28 : f32 to vector<8x512xf32>
    %62 = arith.select %60, %58, %61 : vector<8x512xi1>, vector<8x512xf32>
    %c24 = arith.constant 24 : index
    %c0_29 = arith.constant 0 : index
    %63 = vector.load %arg8[%c24, %c0_29] : memref<72x512xf32, #tpu.memory_space<vmem>>, vector<8x512xf32>
    tpu.vector_store %arg8[%c24, %c0_29], %62 {strides = array<i32>} : memref<72x512xf32, #tpu.memory_space<vmem>>, vector<8x512xf32>,
    %c32 = arith.constant 32 : index
    %c0_30 = arith.constant 0 : index
    %64 = vector.load %arg8[%c32, %c0_30] : memref<72x512xf32, #tpu.memory_space<vmem>>, vector<8x512xf32>
    tpu.vector_store %arg8[%c32, %c0_30], %39 {strides = array<i32>} : memref<72x512xf32, #tpu.memory_space<vmem>>, vector<8x512xf32>,
    %c511_i32 = arith.constant 511 : i32
    %65 = tpu.dynamic_rotate %39 by %c511_i32 dim 1 : vector<8x512xf32>, i32 -> vector<8x512xf32>
    %cst_31 = arith.constant 0.000000e+00 : f32
    %66 = vector.shape_cast %20 : vector<1x512xi1> to vector<1x512xi1>
    %67 = vector.broadcast %66 : vector<1x512xi1> to vector<8x512xi1>
    %68 = vector.broadcast %cst_31 : f32 to vector<8x512xf32>
    %69 = arith.select %67, %65, %68 : vector<8x512xi1>, vector<8x512xf32>
    %c40 = arith.constant 40 : index
    %c0_32 = arith.constant 0 : index
    %70 = vector.load %arg8[%c40, %c0_32] : memref<72x512xf32, #tpu.memory_space<vmem>>, vector<8x512xf32>
    tpu.vector_store %arg8[%c40, %c0_32], %69 {strides = array<i32>} : memref<72x512xf32, #tpu.memory_space<vmem>>, vector<8x512xf32>,
    %c497_i32 = arith.constant 497 : i32
    %71 = tpu.dynamic_rotate %39 by %c497_i32 dim 1 : vector<8x512xf32>, i32 -> vector<8x512xf32>
    %cst_33 = arith.constant 0.000000e+00 : f32
    %72 = vector.shape_cast %25 : vector<1x512xi1> to vector<1x512xi1>
    %73 = vector.broadcast %72 : vector<1x512xi1> to vector<8x512xi1>
    %74 = vector.broadcast %cst_33 : f32 to vector<8x512xf32>
    %75 = arith.select %73, %71, %74 : vector<8x512xi1>, vector<8x512xf32>
    %c48 = arith.constant 48 : index
    %c0_34 = arith.constant 0 : index
    %76 = vector.load %arg8[%c48, %c0_34] : memref<72x512xf32, #tpu.memory_space<vmem>>, vector<8x512xf32>
    tpu.vector_store %arg8[%c48, %c0_34], %75 {strides = array<i32>} : memref<72x512xf32, #tpu.memory_space<vmem>>, vector<8x512xf32>,
    %c496_i32 = arith.constant 496 : i32
    %77 = tpu.dynamic_rotate %39 by %c496_i32 dim 1 : vector<8x512xf32>, i32 -> vector<8x512xf32>
    %cst_35 = arith.constant 0.000000e+00 : f32
    %78 = vector.shape_cast %27 : vector<1x512xi1> to vector<1x512xi1>
    %79 = vector.broadcast %78 : vector<1x512xi1> to vector<8x512xi1>
    %80 = vector.broadcast %cst_35 : f32 to vector<8x512xf32>
    %81 = arith.select %79, %77, %80 : vector<8x512xi1>, vector<8x512xf32>
    %c56 = arith.constant 56 : index
    %c0_36 = arith.constant 0 : index
    %82 = vector.load %arg8[%c56, %c0_36] : memref<72x512xf32, #tpu.memory_space<vmem>>, vector<8x512xf32>
    tpu.vector_store %arg8[%c56, %c0_36], %81 {strides = array<i32>} : memref<72x512xf32, #tpu.memory_space<vmem>>, vector<8x512xf32>,
    %c495_i32 = arith.constant 495 : i32
    %83 = tpu.dynamic_rotate %39 by %c495_i32 dim 1 : vector<8x512xf32>, i32 -> vector<8x512xf32>
    %cst_37 = arith.constant 0.000000e+00 : f32
    %84 = vector.shape_cast %32 : vector<1x512xi1> to vector<1x512xi1>
    %85 = vector.broadcast %84 : vector<1x512xi1> to vector<8x512xi1>
    %86 = vector.broadcast %cst_37 : f32 to vector<8x512xf32>
    %87 = arith.select %85, %83, %86 : vector<8x512xi1>, vector<8x512xf32>
    %c64 = arith.constant 64 : index
    %c0_38 = arith.constant 0 : index
    %88 = vector.load %arg8[%c64, %c0_38] : memref<72x512xf32, #tpu.memory_space<vmem>>, vector<8x512xf32>
    tpu.vector_store %arg8[%c64, %c0_38], %87 {strides = array<i32>} : memref<72x512xf32, #tpu.memory_space<vmem>>, vector<8x512xf32>,
    %c0_39 = arith.constant 0 : index
    %c0_40 = arith.constant 0 : index
    %89 = vector.load %arg8[%c0_39, %c0_40] : memref<72x512xf32, #tpu.memory_space<vmem>>, vector<72x512xf32>
    %cst_41 = arith.constant dense<0.000000e+00> : vector<8x512xf32>
    %90 = tpu.matmul %33, %89, %cst_41 {dimension_numbers = #tpu.dot_dimension_numbers<[1], [0], [0], [1], [0, 0, 1, 1], [], []>} : vector<8x72xf32>, vector<72x512xf32>, vector<8x512xf32> -> vector<8x512xf32>
    %91 = vector.broadcast %35 : vector<8x1xf32> to vector<8x512xf32>
    %92 = arith.addf %90, %91 : vector<8x512xf32>
    %cst_42 = arith.constant 0.000000e+00 : f32
    %93 = vector.broadcast %cst_42 : f32 to vector<8x512xf32>
    %94 = arith.maximumf %92, %93 : vector<8x512xf32>
    %c17_i32_43 = arith.constant 17 : i32
    %95 = tpu.dynamic_rotate %94 by %c17_i32_43 dim 1 : vector<8x512xf32>, i32 -> vector<8x512xf32>
    %cst_44 = arith.constant 0.000000e+00 : f32
    %96 = vector.shape_cast %9 : vector<1x512xi1> to vector<1x512xi1>
    %97 = vector.broadcast %96 : vector<1x512xi1> to vector<8x512xi1>
    %98 = vector.broadcast %cst_44 : f32 to vector<8x512xf32>
    %99 = arith.select %97, %95, %98 : vector<8x512xi1>, vector<8x512xf32>
    %c0_45 = arith.constant 0 : index
    %c0_46 = arith.constant 0 : index
    %100 = vector.load %arg8[%c0_45, %c0_46] : memref<72x512xf32, #tpu.memory_space<vmem>>, vector<8x512xf32>
    tpu.vector_store %arg8[%c0_45, %c0_46], %99 {strides = array<i32>} : memref<72x512xf32, #tpu.memory_space<vmem>>, vector<8x512xf32>,
    %c16_i32_47 = arith.constant 16 : i32
    %101 = tpu.dynamic_rotate %94 by %c16_i32_47 dim 1 : vector<8x512xf32>, i32 -> vector<8x512xf32>
    %cst_48 = arith.constant 0.000000e+00 : f32
    %102 = vector.shape_cast %11 : vector<1x512xi1> to vector<1x512xi1>
    %103 = vector.broadcast %102 : vector<1x512xi1> to vector<8x512xi1>
    %104 = vector.broadcast %cst_48 : f32 to vector<8x512xf32>
    %105 = arith.select %103, %101, %104 : vector<8x512xi1>, vector<8x512xf32>
    %c8_49 = arith.constant 8 : index
    %c0_50 = arith.constant 0 : index
    %106 = vector.load %arg8[%c8_49, %c0_50] : memref<72x512xf32, #tpu.memory_space<vmem>>, vector<8x512xf32>
    tpu.vector_store %arg8[%c8_49, %c0_50], %105 {strides = array<i32>} : memref<72x512xf32, #tpu.memory_space<vmem>>, vector<8x512xf32>,
    %c15_i32_51 = arith.constant 15 : i32
    %107 = tpu.dynamic_rotate %94 by %c15_i32_51 dim 1 : vector<8x512xf32>, i32 -> vector<8x512xf32>
    %cst_52 = arith.constant 0.000000e+00 : f32
    %108 = vector.shape_cast %16 : vector<1x512xi1> to vector<1x512xi1>
    %109 = vector.broadcast %108 : vector<1x512xi1> to vector<8x512xi1>
    %110 = vector.broadcast %cst_52 : f32 to vector<8x512xf32>
    %111 = arith.select %109, %107, %110 : vector<8x512xi1>, vector<8x512xf32>
    %c16_53 = arith.constant 16 : index
    %c0_54 = arith.constant 0 : index
    %112 = vector.load %arg8[%c16_53, %c0_54] : memref<72x512xf32, #tpu.memory_space<vmem>>, vector<8x512xf32>
    tpu.vector_store %arg8[%c16_53, %c0_54], %111 {strides = array<i32>} : memref<72x512xf32, #tpu.memory_space<vmem>>, vector<8x512xf32>,
    %c1_i32_55 = arith.constant 1 : i32
    %113 = tpu.dynamic_rotate %94 by %c1_i32_55 dim 1 : vector<8x512xf32>, i32 -> vector<8x512xf32>
    %cst_56 = arith.constant 0.000000e+00 : f32
    %114 = vector.shape_cast %18 : vector<1x512xi1> to vector<1x512xi1>
    %115 = vector.broadcast %114 : vector<1x512xi1> to vector<8x512xi1>
    %116 = vector.broadcast %cst_56 : f32 to vector<8x512xf32>
    %117 = arith.select %115, %113, %116 : vector<8x512xi1>, vector<8x512xf32>
    %c24_57 = arith.constant 24 : index
    %c0_58 = arith.constant 0 : index
    %118 = vector.load %arg8[%c24_57, %c0_58] : memref<72x512xf32, #tpu.memory_space<vmem>>, vector<8x512xf32>
    tpu.vector_store %arg8[%c24_57, %c0_58], %117 {strides = array<i32>} : memref<72x512xf32, #tpu.memory_space<vmem>>, vector<8x512xf32>,
    %c32_59 = arith.constant 32 : index
    %c0_60 = arith.constant 0 : index
    %119 = vector.load %arg8[%c32_59, %c0_60] : memref<72x512xf32, #tpu.memory_space<vmem>>, vector<8x512xf32>
    tpu.vector_store %arg8[%c32_59, %c0_60], %94 {strides = array<i32>} : memref<72x512xf32, #tpu.memory_space<vmem>>, vector<8x512xf32>,
    %c511_i32_61 = arith.constant 511 : i32
    %120 = tpu.dynamic_rotate %94 by %c511_i32_61 dim 1 : vector<8x512xf32>, i32 -> vector<8x512xf32>
    %cst_62 = arith.constant 0.000000e+00 : f32
    %121 = vector.shape_cast %20 : vector<1x512xi1> to vector<1x512xi1>
    %122 = vector.broadcast %121 : vector<1x512xi1> to vector<8x512xi1>
    %123 = vector.broadcast %cst_62 : f32 to vector<8x512xf32>
    %124 = arith.select %122, %120, %123 : vector<8x512xi1>, vector<8x512xf32>
    %c40_63 = arith.constant 40 : index
    %c0_64 = arith.constant 0 : index
    %125 = vector.load %arg8[%c40_63, %c0_64] : memref<72x512xf32, #tpu.memory_space<vmem>>, vector<8x512xf32>
    tpu.vector_store %arg8[%c40_63, %c0_64], %124 {strides = array<i32>} : memref<72x512xf32, #tpu.memory_space<vmem>>, vector<8x512xf32>,
    %c497_i32_65 = arith.constant 497 : i32
    %126 = tpu.dynamic_rotate %94 by %c497_i32_65 dim 1 : vector<8x512xf32>, i32 -> vector<8x512xf32>
    %cst_66 = arith.constant 0.000000e+00 : f32
    %127 = vector.shape_cast %25 : vector<1x512xi1> to vector<1x512xi1>
    %128 = vector.broadcast %127 : vector<1x512xi1> to vector<8x512xi1>
    %129 = vector.broadcast %cst_66 : f32 to vector<8x512xf32>
    %130 = arith.select %128, %126, %129 : vector<8x512xi1>, vector<8x512xf32>
    %c48_67 = arith.constant 48 : index
    %c0_68 = arith.constant 0 : index
    %131 = vector.load %arg8[%c48_67, %c0_68] : memref<72x512xf32, #tpu.memory_space<vmem>>, vector<8x512xf32>
    tpu.vector_store %arg8[%c48_67, %c0_68], %130 {strides = array<i32>} : memref<72x512xf32, #tpu.memory_space<vmem>>, vector<8x512xf32>,
    %c496_i32_69 = arith.constant 496 : i32
    %132 = tpu.dynamic_rotate %94 by %c496_i32_69 dim 1 : vector<8x512xf32>, i32 -> vector<8x512xf32>
    %cst_70 = arith.constant 0.000000e+00 : f32
    %133 = vector.shape_cast %27 : vector<1x512xi1> to vector<1x512xi1>
    %134 = vector.broadcast %133 : vector<1x512xi1> to vector<8x512xi1>
    %135 = vector.broadcast %cst_70 : f32 to vector<8x512xf32>
    %136 = arith.select %134, %132, %135 : vector<8x512xi1>, vector<8x512xf32>
    %c56_71 = arith.constant 56 : index
    %c0_72 = arith.constant 0 : index
    %137 = vector.load %arg8[%c56_71, %c0_72] : memref<72x512xf32, #tpu.memory_space<vmem>>, vector<8x512xf32>
    tpu.vector_store %arg8[%c56_71, %c0_72], %136 {strides = array<i32>} : memref<72x512xf32, #tpu.memory_space<vmem>>, vector<8x512xf32>,
    %c495_i32_73 = arith.constant 495 : i32
    %138 = tpu.dynamic_rotate %94 by %c495_i32_73 dim 1 : vector<8x512xf32>, i32 -> vector<8x512xf32>
    %cst_74 = arith.constant 0.000000e+00 : f32
    %139 = vector.shape_cast %32 : vector<1x512xi1> to vector<1x512xi1>
    %140 = vector.broadcast %139 : vector<1x512xi1> to vector<8x512xi1>
    %141 = vector.broadcast %cst_74 : f32 to vector<8x512xf32>
    %142 = arith.select %140, %138, %141 : vector<8x512xi1>, vector<8x512xf32>
    %c64_75 = arith.constant 64 : index
    %c0_76 = arith.constant 0 : index
    %143 = vector.load %arg8[%c64_75, %c0_76] : memref<72x512xf32, #tpu.memory_space<vmem>>, vector<8x512xf32>
    tpu.vector_store %arg8[%c64_75, %c0_76], %142 {strides = array<i32>} : memref<72x512xf32, #tpu.memory_space<vmem>>, vector<8x512xf32>,
    %c0_77 = arith.constant 0 : index
    %c0_78 = arith.constant 0 : index
    %144 = vector.load %arg8[%c0_77, %c0_78] : memref<72x512xf32, #tpu.memory_space<vmem>>, vector<72x512xf32>
    %cst_79 = arith.constant dense<0.000000e+00> : vector<8x512xf32>
    %145 = tpu.matmul %34, %144, %cst_79 {dimension_numbers = #tpu.dot_dimension_numbers<[1], [0], [0], [1], [0, 0, 1, 1], [], []>} : vector<8x72xf32>, vector<72x512xf32>, vector<8x512xf32> -> vector<8x512xf32>
    %146 = vector.broadcast %36 : vector<8x1xf32> to vector<8x512xf32>
    %147 = arith.addf %145, %146 : vector<8x512xf32>
    %cst_80 = arith.constant 0.000000e+00 : f32
    %148 = vector.broadcast %cst_80 : f32 to vector<8x512xf32>
    %149 = arith.maximumf %147, %148 : vector<8x512xf32>
    %c0_81 = arith.constant 0 : index
    %c0_82 = arith.constant 0 : index
    %150 = vector.load %arg7[%c0_81, %c0_82] : memref<8x512xf32, #tpu.memory_space<vmem>>, vector<8x512xf32>
    tpu.vector_store %arg7[%c0_81, %c0_82], %149 {strides = array<i32>} : memref<8x512xf32, #tpu.memory_space<vmem>>, vector<8x512xf32>,
    return
  }
  func.func @transform_0(%arg0: i32) -> (i32, i32) {
    %c0_i32 = arith.constant 0 : i32
    %c0_i32_0 = arith.constant 0 : i32
    %c0_i32_1 = arith.constant 0 : i32
    return %c0_i32, %c0_i32_0 : i32, i32
  }
  func.func @transform_1(%arg0: i32) -> (i32, i32) {
    %c0_i32 = arith.constant 0 : i32
    %c0_i32_0 = arith.constant 0 : i32
    %c0_i32_1 = arith.constant 0 : i32
    return %c0_i32, %c0_i32_0 : i32, i32
  }
  func.func @transform_2(%arg0: i32) -> (i32, i32) {
    %c0_i32 = arith.constant 0 : i32
    %c0_i32_0 = arith.constant 0 : i32
    %c0_i32_1 = arith.constant 0 : i32
    return %c0_i32, %c0_i32_0 : i32, i32
  }
  func.func @transform_3(%arg0: i32) -> (i32, i32) {
    %c0_i32 = arith.constant 0 : i32
    %c0_i32_0 = arith.constant 0 : i32
    %c0_i32_1 = arith.constant 0 : i32
    return %c0_i32, %c0_i32_0 : i32, i32
  }
  func.func @transform_4(%arg0: i32) -> (i32, i32) {
    %c0_i32 = arith.constant 0 : i32
    %c0_i32_0 = arith.constant 0 : i32
    %c0_i32_1 = arith.constant 0 : i32
    return %c0_i32, %c0_i32_0 : i32, i32
  }
  func.func @transform_5(%arg0: i32) -> (i32, i32) {
    %c0_i32 = arith.constant 0 : i32
    %c0_i32_0 = arith.constant 0 : i32
    %c0_i32_1 = arith.constant 0 : i32
    return %c0_i32, %c0_i32_0 : i32, i32
  }
  func.func @transform_6(%arg0: i32) -> (i32, i32) {
    %c0_i32 = arith.constant 0 : i32
    %c0_i32_0 = arith.constant 0 : i32
    %c0_i32_1 = arith.constant 0 : i32
    return %c0_i32, %c0_i32_0 : i32, i32
  }
}

</mosaic_0001>

<llo_original>
// kernel: query_module_forward.1
$region0: #{query_module_forward.1}
  #allocation0 [shape = 'u32[]', space=smem, size = 0x4, offset = 0x4, fixed_abs, tag = 'smem constant byte address 0x4 - core index']
  #allocation1 [shape = 'u32[144,128]{1,0:T(1,128)}', space=vmem, size = 0x12000, scoped, tag = 'internal scratch']
  #allocation2 [shape = 'f32[72,512]{1,0:T(8,128)}', space=vmem, size = 0x24000, scoped, tag = 'scratch operand']
  %s0 = inlined_call_operand.vmem [shape: f32[8,512], index: 0, kind: input, shape index: {}]
  %s1 = inlined_call_operand.vmem [shape: f32[8,512], index: 1, kind: input, shape index: {}]
  %s2 = inlined_call_operand.vmem [shape: f32[8,72], index: 2, kind: input, shape index: {}]
  %s3 = inlined_call_operand.vmem [shape: f32[8,1], index: 3, kind: input, shape index: {}]
  %s4 = inlined_call_operand.vmem [shape: f32[8,72], index: 4, kind: input, shape index: {}]
  %s5 = inlined_call_operand.vmem [shape: f32[8,1], index: 5, kind: input, shape index: {}]
  %s6 = inlined_call_operand.vmem [shape: f32[8,512], index: 6, kind: output, shape index: {}]
  %s7 = sld [smem:[#allocation0]]
  $region34: #{query_module_forward.1} parent=0
    _
  %s9 = ssub.s32 1, %s7
  %s10 = scalar_select 0, %s9, %s7
  // Predicated region
  $region2: #{query_module_forward.1} parent=0 // pred_check
    _
  $region3: #{query_module_forward.1} parent=0 // pred_check_branch
    %12 = sbr.rel (0) target = $region5
  $region4: #{query_module_forward.1} parent=0 // pred_region
    _
  $region5: #{query_module_forward.1} parent=0 // pred_fallthru
    _
  // Predicated region
  $region6: #{query_module_forward.1} parent=0 // pred_check
    _
  $region7: #{query_module_forward.1} parent=0 // pred_check_branch
    %14 = sbr.rel (0) target = $region9
  $region8: #{query_module_forward.1} parent=0 // pred_region
    _
  $region9: #{query_module_forward.1} parent=0 // pred_fallthru
    _
  // Predicated region
  $region10: #{query_module_forward.1} parent=0 // pred_check
    _
  $region11: #{query_module_forward.1} parent=0 // pred_check_branch
    %16 = sbr.rel (0) target = $region13
  $region12: #{query_module_forward.1} parent=0 // pred_region
    _
  $region13: #{query_module_forward.1} parent=0 // pred_fallthru
    _
  // Predicated region
  $region14: #{query_module_forward.1} parent=0 // pred_check
    _
  $region15: #{query_module_forward.1} parent=0 // pred_check_branch
    %18 = sbr.rel (0) target = $region17
  $region16: #{query_module_forward.1} parent=0 // pred_region
    _
  $region17: #{query_module_forward.1} parent=0 // pred_fallthru
    _
  // Predicated region
  $region18: #{query_module_forward.1} parent=0 // pred_check
    _
  $region19: #{query_module_forward.1} parent=0 // pred_check_branch
    %20 = sbr.rel (0) target = $region21
  $region20: #{query_module_forward.1} parent=0 // pred_region
    _
  $region21: #{query_module_forward.1} parent=0 // pred_fallthru
    _
  // Predicated region
  $region22: #{query_module_forward.1} parent=0 // pred_check
    _
  $region23: #{query_module_forward.1} parent=0 // pred_check_branch
    %22 = sbr.rel (0) target = $region25
  $region24: #{query_module_forward.1} parent=0 // pred_region
    _
  $region25: #{query_module_forward.1} parent=0 // pred_fallthru
    _
  %v23 = vlaneseq
  %v24 = vand.u32 %v23, 127
  %v25 = vadd.s32 %v24, 128
  %v26 = vadd.s32 %v24, 256
  %v27 = vadd.s32 %v24, 384
  %v28 = vand.u32 %v24, 255
  %v29 = vand.u32 %v25, 255
  %v30 = vand.u32 %v26, 255
  %v31 = vand.u32 %v27, 255
  %v32 = vand.u32 %v28, 15
  %v33 = vand.u32 %v29, 15
  %v34 = vand.u32 %v30, 15
  %v35 = vand.u32 %v31, 15
  %vm36 = vcmp.ge.s32.totalorder %v28, 16
  %vm37 = vcmp.ge.s32.totalorder %v29, 16
  %vm38 = vcmp.ge.s32.totalorder %v30, 16
  %vm39 = vcmp.ge.s32.totalorder %v31, 16
  %vm40 = vcmp.ge.s32.totalorder %v32, 1
  %vm41 = vcmp.ge.s32.totalorder %v33, 1
  %vm42 = vcmp.ge.s32.totalorder %v34, 1
  %vm43 = vcmp.ge.s32.totalorder %v35, 1
  %vm44 = vmand %vm36, %vm40
  %vm45 = vmand %vm37, %vm41
  %vm46 = vmand %vm38, %vm42
  %vm47 = vmand %vm39, %vm43
  %vm48 = vcmp.le.s32.totalorder %v32, 14
  %vm49 = vcmp.le.s32.totalorder %v33, 14
  %vm50 = vcmp.le.s32.totalorder %v34, 14
  %vm51 = vcmp.le.s32.totalorder %v35, 14
  %vm52 = vmand %vm36, %vm48
  %vm53 = vmand %vm37, %vm49
  %vm54 = vmand %vm38, %vm50
  %vm55 = vmand %vm39, %vm51
  %vm56 = vcmp.lt.s32.totalorder %v28, 240
  %vm57 = vcmp.lt.s32.totalorder %v29, 240
  %vm58 = vcmp.lt.s32.totalorder %v30, 240
  %vm59 = vcmp.lt.s32.totalorder %v31, 240
  %vm60 = vmand %vm56, %vm40
  %vm61 = vmand %vm57, %vm41
  %vm62 = vmand %vm58, %vm42
  %vm63 = vmand %vm59, %vm43
  %vm64 = vmand %vm56, %vm48
  %vm65 = vmand %vm57, %vm49
  %vm66 = vmand %vm58, %vm50
  %vm67 = vmand %vm59, %vm51
  %v68 = vld [vmem:[%s2] sm:$0xff]
  %v69 = vld [vmem:[%s4] sm:$0xff]
  %v70 = vld [vmem:[%s3] sm:$0xff]
  %v71 = vld [vmem:[%s5] sm:$0xff]
  %v72 = vld [vmem:[%s0] sm:$0xff]
  %v73 = vld [vmem:[%s0 + $0x8] sm:$0xff]
  %v74 = vld [vmem:[%s0 + $0x10] sm:$0xff]
  %v75 = vld [vmem:[%s0 + $0x18] sm:$0xff]
  %v76 = vld [vmem:[%s1] sm:$0xff]
  %v77 = vld [vmem:[%s1 + $0x8] sm:$0xff]
  %v78 = vld [vmem:[%s1 + $0x10] sm:$0xff]
  %v79 = vld [vmem:[%s1 + $0x18] sm:$0xff]
  %v80 = vmul.f32 %v72, %v76
  %v81 = vmul.f32 %v73, %v77
  %v82 = vmul.f32 %v74, %v78
  %v83 = vmul.f32 %v75, %v79
  %84 = vrot.lane.b32.xlu0 %v80, 17
  %v85 = vpop.permute.xlu0 %84
  %86 = vrot.lane.b32.xlu0 %v81, 17
  %v87 = vpop.permute.xlu0 %86
  %88 = vrot.lane.b32.xlu0 %v82, 17
  %v89 = vpop.permute.xlu0 %88
  %90 = vrot.lane.b32.xlu0 %v83, 17
  %v91 = vpop.permute.xlu0 %90
  %vm92 = vcmp.lt.s32.totalorder %v24, 17
  %v93 = vsel %vm92, %v89, %v91
  %v94 = vsel %vm92, %v87, %v89
  %v95 = vsel %vm92, %v85, %v87
  %v96 = vsel %vm92, %v91, %v85
  %v97 = vsel %vm44, 1, 0
  %v98 = vsel %vm45, 1, 0
  %v99 = vsel %vm46, 1, 0
  %v100 = vsel %vm47, 1, 0
  %vm101 = vcmp.eq.s32.totalorder %v97, 1
  %vm102 = vcmp.eq.s32.totalorder %v98, 1
  %vm103 = vcmp.eq.s32.totalorder %v99, 1
  %vm104 = vcmp.eq.s32.totalorder %v100, 1
  %v105 = vsel %vm101, %v96, 0.0
  %v106 = vsel %vm102, %v95, 0.0
  %v107 = vsel %vm103, %v94, 0.0
  %v108 = vsel %vm104, %v93, 0.0
  %109 = vst [vmem:[#allocation2] sm:$0xff] %v105
  %110 = vst [vmem:[#allocation2 + $0x8] sm:$0xff] %v106
  %111 = vst [vmem:[#allocation2 + $0x10] sm:$0xff] %v107
  %112 = vst [vmem:[#allocation2 + $0x18] sm:$0xff] %v108
  %113 = vrot.lane.b32.xlu0 %v80, 16
  %v114 = vpop.permute.xlu0 %113
  %115 = vrot.lane.b32.xlu0 %v81, 16
  %v116 = vpop.permute.xlu0 %115
  %117 = vrot.lane.b32.xlu0 %v82, 16
  %v118 = vpop.permute.xlu0 %117
  %119 = vrot.lane.b32.xlu0 %v83, 16
  %v120 = vpop.permute.xlu0 %119
  %vm121 = vcmp.lt.s32.totalorder %v24, 16
  %v122 = vsel %vm121, %v118, %v120
  %v123 = vsel %vm121, %v116, %v118
  %v124 = vsel %vm121, %v114, %v116
  %v125 = vsel %vm121, %v120, %v114
  %v126 = vsel %vm36, 1, 0
  %v127 = vsel %vm37, 1, 0
  %v128 = vsel %vm38, 1, 0
  %v129 = vsel %vm39, 1, 0
  %vm130 = vcmp.eq.s32.totalorder %v126, 1
  %vm131 = vcmp.eq.s32.totalorder %v127, 1
  %vm132 = vcmp.eq.s32.totalorder %v128, 1
  %vm133 = vcmp.eq.s32.totalorder %v129, 1
  %v134 = vsel %vm130, %v125, 0.0
  %v135 = vsel %vm131, %v124, 0.0
  %v136 = vsel %vm132, %v123, 0.0
  %v137 = vsel %vm133, %v122, 0.0
  %138 = vst [vmem:[#allocation2 + $0x20] sm:$0xff] %v134
  %139 = vst [vmem:[#allocation2 + $0x28] sm:$0xff] %v135
  %140 = vst [vmem:[#allocation2 + $0x30] sm:$0xff] %v136
  %141 = vst [vmem:[#allocation2 + $0x38] sm:$0xff] %v137
  %142 = vrot.lane.b32.xlu0 %v80, 15
  %v143 = vpop.permute.xlu0 %142
  %144 = vrot.lane.b32.xlu0 %v81, 15
  %v145 = vpop.permute.xlu0 %144
  %146 = vrot.lane.b32.xlu0 %v82, 15
  %v147 = vpop.permute.xlu0 %146
  %148 = vrot.lane.b32.xlu0 %v83, 15
  %v149 = vpop.permute.xlu0 %148
  %vm150 = vcmp.lt.s32.totalorder %v24, 15
  %v151 = vsel %vm150, %v147, %v149
  %v152 = vsel %vm150, %v145, %v147
  %v153 = vsel %vm150, %v143, %v145
  %v154 = vsel %vm150, %v149, %v143
  %v155 = vsel %vm52, 1, 0
  %v156 = vsel %vm53, 1, 0
  %v157 = vsel %vm54, 1, 0
  %v158 = vsel %vm55, 1, 0
  %vm159 = vcmp.eq.s32.totalorder %v155, 1
  %vm160 = vcmp.eq.s32.totalorder %v156, 1
  %vm161 = vcmp.eq.s32.totalorder %v157, 1
  %vm162 = vcmp.eq.s32.totalorder %v158, 1
  %v163 = vsel %vm159, %v154, 0.0
  %v164 = vsel %vm160, %v153, 0.0
  %v165 = vsel %vm161, %v152, 0.0
  %v166 = vsel %vm162, %v151, 0.0
  %167 = vst [vmem:[#allocation2 + $0x40] sm:$0xff] %v163
  %168 = vst [vmem:[#allocation2 + $0x48] sm:$0xff] %v164
  %169 = vst [vmem:[#allocation2 + $0x50] sm:$0xff] %v165
  %170 = vst [vmem:[#allocation2 + $0x58] sm:$0xff] %v166
  %171 = vrot.lane.b32.xlu0 %v80, 1
  %v172 = vpop.permute.xlu0 %171
  %173 = vrot.lane.b32.xlu0 %v81, 1
  %v174 = vpop.permute.xlu0 %173
  %175 = vrot.lane.b32.xlu0 %v82, 1
  %v176 = vpop.permute.xlu0 %175
  %177 = vrot.lane.b32.xlu0 %v83, 1
  %v178 = vpop.permute.xlu0 %177
  %vm179 = vcmp.lt.s32.totalorder %v24, 1
  %v180 = vsel %vm179, %v176, %v178
  %v181 = vsel %vm179, %v174, %v176
  %v182 = vsel %vm179, %v172, %v174
  %v183 = vsel %vm179, %v178, %v172
  %v184 = vsel %vm40, 1, 0
  %v185 = vsel %vm41, 1, 0
  %v186 = vsel %vm42, 1, 0
  %v187 = vsel %vm43, 1, 0
  %vm188 = vcmp.eq.s32.totalorder %v184, 1
  %vm189 = vcmp.eq.s32.totalorder %v185, 1
  %vm190 = vcmp.eq.s32.totalorder %v186, 1
  %vm191 = vcmp.eq.s32.totalorder %v187, 1
  %v192 = vsel %vm188, %v183, 0.0
  %v193 = vsel %vm189, %v182, 0.0
  %v194 = vsel %vm190, %v181, 0.0
  %v195 = vsel %vm191, %v180, 0.0
  %196 = vst [vmem:[#allocation2 + $0x60] sm:$0xff] %v192
  %197 = vst [vmem:[#allocation2 + $0x68] sm:$0xff] %v193
  %198 = vst [vmem:[#allocation2 + $0x70] sm:$0xff] %v194
  %199 = vst [vmem:[#allocation2 + $0x78] sm:$0xff] %v195
  %200 = vst [vmem:[#allocation2 + $0x80] sm:$0xff] %v80
  %201 = vst [vmem:[#allocation2 + $0x88] sm:$0xff] %v81
  %202 = vst [vmem:[#allocation2 + $0x90] sm:$0xff] %v82
  %203 = vst [vmem:[#allocation2 + $0x98] sm:$0xff] %v83
  %204 = vrot.lane.b32.xlu0 %v80, 127
  %v205 = vpop.permute.xlu0 %204
  %206 = vrot.lane.b32.xlu0 %v81, 127
  %v207 = vpop.permute.xlu0 %206
  %208 = vrot.lane.b32.xlu0 %v82, 127
  %v209 = vpop.permute.xlu0 %208
  %210 = vrot.lane.b32.xlu0 %v83, 127
  %v211 = vpop.permute.xlu0 %210
  %vm212 = vcmp.lt.s32.totalorder %v24, 127
  %v213 = vsel %vm212, %v209, %v211
  %v214 = vsel %vm212, %v207, %v209
  %v215 = vsel %vm212, %v205, %v207
  %v216 = vsel %vm212, %v211, %v205
  %v217 = vsel %vm48, 1, 0
  %v218 = vsel %vm49, 1, 0
  %v219 = vsel %vm50, 1, 0
  %v220 = vsel %vm51, 1, 0
  %vm221 = vcmp.eq.s32.totalorder %v217, 1
  %vm222 = vcmp.eq.s32.totalorder %v218, 1
  %vm223 = vcmp.eq.s32.totalorder %v219, 1
  %vm224 = vcmp.eq.s32.totalorder %v220, 1
  %v225 = vsel %vm221, %v215, 0.0
  %v226 = vsel %vm222, %v214, 0.0
  %v227 = vsel %vm223, %v213, 0.0
  %v228 = vsel %vm224, %v216, 0.0
  %229 = vst [vmem:[#allocation2 + $0xa0] sm:$0xff] %v225
  %230 = vst [vmem:[#allocation2 + $0xa8] sm:$0xff] %v226
  %231 = vst [vmem:[#allocation2 + $0xb0] sm:$0xff] %v227
  %232 = vst [vmem:[#allocation2 + $0xb8] sm:$0xff] %v228
  %233 = vrot.lane.b32.xlu0 %v80, 113
  %v234 = vpop.permute.xlu0 %233
  %235 = vrot.lane.b32.xlu0 %v81, 113
  %v236 = vpop.permute.xlu0 %235
  %237 = vrot.lane.b32.xlu0 %v82, 113
  %v238 = vpop.permute.xlu0 %237
  %239 = vrot.lane.b32.xlu0 %v83, 113
  %v240 = vpop.permute.xlu0 %239
  %vm241 = vcmp.lt.s32.totalorder %v24, 113
  %v242 = vsel %vm241, %v238, %v240
  %v243 = vsel %vm241, %v236, %v238
  %v244 = vsel %vm241, %v234, %v236
  %v245 = vsel %vm241, %v240, %v234
  %v246 = vsel %vm60, 1, 0
  %v247 = vsel %vm61, 1, 0
  %v248 = vsel %vm62, 1, 0
  %v249 = vsel %vm63, 1, 0
  %vm250 = vcmp.eq.s32.totalorder %v246, 1
  %vm251 = vcmp.eq.s32.totalorder %v247, 1
  %vm252 = vcmp.eq.s32.totalorder %v248, 1
  %vm253 = vcmp.eq.s32.totalorder %v249, 1
  %v254 = vsel %vm250, %v244, 0.0
  %v255 = vsel %vm251, %v243, 0.0
  %v256 = vsel %vm252, %v242, 0.0
  %v257 = vsel %vm253, %v245, 0.0
  %258 = vst [vmem:[#allocation2 + $0xc0] sm:$0xff] %v254
  %259 = vst [vmem:[#allocation2 + $0xc8] sm:$0xff] %v255
  %260 = vst [vmem:[#allocation2 + $0xd0] sm:$0xff] %v256
  %261 = vst [vmem:[#allocation2 + $0xd8] sm:$0xff] %v257
  %262 = vrot.lane.b32.xlu0 %v80, 112
  %v263 = vpop.permute.xlu0 %262
  %264 = vrot.lane.b32.xlu0 %v81, 112
  %v265 = vpop.permute.xlu0 %264
  %266 = vrot.lane.b32.xlu0 %v82, 112
  %v267 = vpop.permute.xlu0 %266
  %268 = vrot.lane.b32.xlu0 %v83, 112
  %v269 = vpop.permute.xlu0 %268
  %vm270 = vcmp.lt.s32.totalorder %v24, 112
  %v271 = vsel %vm270, %v267, %v269
  %v272 = vsel %vm270, %v265, %v267
  %v273 = vsel %vm270, %v263, %v265
  %v274 = vsel %vm270, %v269, %v263
  %v275 = vsel %vm56, 1, 0
  %v276 = vsel %vm57, 1, 0
  %v277 = vsel %vm58, 1, 0
  %v278 = vsel %vm59, 1, 0
  %vm279 = vcmp.eq.s32.totalorder %v275, 1
  %vm280 = vcmp.eq.s32.totalorder %v276, 1
  %vm281 = vcmp.eq.s32.totalorder %v277, 1
  %vm282 = vcmp.eq.s32.totalorder %v278, 1
  %v283 = vsel %vm279, %v273, 0.0
  %v284 = vsel %vm280, %v272, 0.0
  %v285 = vsel %vm281, %v271, 0.0
  %v286 = vsel %vm282, %v274, 0.0
  %287 = vst [vmem:[#allocation2 + $0xe0] sm:$0xff] %v283
  %288 = vst [vmem:[#allocation2 + $0xe8] sm:$0xff] %v284
  %289 = vst [vmem:[#allocation2 + $0xf0] sm:$0xff] %v285
  %290 = vst [vmem:[#allocation2 + $0xf8] sm:$0xff] %v286
  %291 = vrot.lane.b32.xlu0 %v80, 111
  %v292 = vpop.permute.xlu0 %291
  %293 = vrot.lane.b32.xlu0 %v81, 111
  %v294 = vpop.permute.xlu0 %293
  %295 = vrot.lane.b32.xlu0 %v82, 111
  %v296 = vpop.permute.xlu0 %295
  %297 = vrot.lane.b32.xlu0 %v83, 111
  %v298 = vpop.permute.xlu0 %297
  %vm299 = vcmp.lt.s32.totalorder %v24, 111
  %v300 = vsel %vm299, %v296, %v298
  %v301 = vsel %vm299, %v294, %v296
  %v302 = vsel %vm299, %v292, %v294
  %v303 = vsel %vm299, %v298, %v292
  %v304 = vsel %vm64, 1, 0
  %v305 = vsel %vm65, 1, 0
  %v306 = vsel %vm66, 1, 0
  %v307 = vsel %vm67, 1, 0
  %vm308 = vcmp.eq.s32.totalorder %v304, 1
  %vm309 = vcmp.eq.s32.totalorder %v305, 1
  %vm310 = vcmp.eq.s32.totalorder %v306, 1
  %vm311 = vcmp.eq.s32.totalorder %v307, 1
  %v312 = vsel %vm308, %v302, 0.0
  %v313 = vsel %vm309, %v301, 0.0
  %v314 = vsel %vm310, %v300, 0.0
  %v315 = vsel %vm311, %v303, 0.0
  %316 = vst [vmem:[#allocation2 + $0x100] sm:$0xff] %v312
  %317 = vst [vmem:[#allocation2 + $0x108] sm:$0xff] %v313
  %318 = vst [vmem:[#allocation2 + $0x110] sm:$0xff] %v314
  %319 = vst [vmem:[#allocation2 + $0x118] sm:$0xff] %v315
  %v320 = vld [vmem:[#allocation2] sm:$0xff]
  %v321 = vld [vmem:[#allocation2 + $0x8] sm:$0xff]
  %v322 = vld [vmem:[#allocation2 + $0x10] sm:$0xff]
  %v323 = vld [vmem:[#allocation2 + $0x18] sm:$0xff]
  %v324 = vld [vmem:[#allocation2 + $0x20] sm:$0xff]
  %v325 = vld [vmem:[#allocation2 + $0x28] sm:$0xff]
  %v326 = vld [vmem:[#allocation2 + $0x30] sm:$0xff]
  %v327 = vld [vmem:[#allocation2 + $0x38] sm:$0xff]
  %v328 = vld [vmem:[#allocation2 + $0x40] sm:$0xff]
  %v329 = vld [vmem:[#allocation2 + $0x48] sm:$0xff]
  %v330 = vld [vmem:[#allocation2 + $0x50] sm:$0xff]
  %v331 = vld [vmem:[#allocation2 + $0x58] sm:$0xff]
  %v332 = vld [vmem:[#allocation2 + $0x60] sm:$0xff]
  %v333 = vld [vmem:[#allocation2 + $0x68] sm:$0xff]
  %v334 = vld [vmem:[#allocation2 + $0x70] sm:$0xff]
  %v335 = vld [vmem:[#allocation2 + $0x78] sm:$0xff]
  %v336 = vld [vmem:[#allocation2 + $0x80] sm:$0xff]
  %v337 = vld [vmem:[#allocation2 + $0x88] sm:$0xff]
  %v338 = vld [vmem:[#allocation2 + $0x90] sm:$0xff]
  %v339 = vld [vmem:[#allocation2 + $0x98] sm:$0xff]
  %v340 = vld [vmem:[#allocation2 + $0xa0] sm:$0xff]
  %v341 = vld [vmem:[#allocation2 + $0xa8] sm:$0xff]
  %v342 = vld [vmem:[#allocation2 + $0xb0] sm:$0xff]
  %v343 = vld [vmem:[#allocation2 + $0xb8] sm:$0xff]
  %v344 = vld [vmem:[#allocation2 + $0xc0] sm:$0xff]
  %v345 = vld [vmem:[#allocation2 + $0xc8] sm:$0xff]
  %v346 = vld [vmem:[#allocation2 + $0xd0] sm:$0xff]
  %v347 = vld [vmem:[#allocation2 + $0xd8] sm:$0xff]
  %v348 = vld [vmem:[#allocation2 + $0xe0] sm:$0xff]
  %v349 = vld [vmem:[#allocation2 + $0xe8] sm:$0xff]
  %v350 = vld [vmem:[#allocation2 + $0xf0] sm:$0xff]
  %v351 = vld [vmem:[#allocation2 + $0xf8] sm:$0xff]
  %v352 = vld [vmem:[#allocation2 + $0x100] sm:$0xff]
  %v353 = vld [vmem:[#allocation2 + $0x108] sm:$0xff]
  %v354 = vld [vmem:[#allocation2 + $0x110] sm:$0xff]
  %v355 = vld [vmem:[#allocation2 + $0x118] sm:$0xff]
  %357 = vset.pattern.permute.xlu0 0
  %358 = vperm.xlu0 %357, %v70
  %v359 = vpop.permute.xlu0 %358
  %vm361 = vcmask 588800
  %v363 = vsel %vm361, %v68, 0
  %365 = vmatprep.subr.mxu0 0.0
  %366 = vmatpush1.msra.mxu0 0.0
  %367 = vmatprep.subr.mxu0 0.0
  %368 = vmatpush1.msra.mxu0 0.0
  %369 = vmatprep.subr.mxu0 0.0
  %370 = vmatpush1.msra.mxu0 0.0
  %371 = vmatprep.subr.mxu0 0.0
  %372 = vmatpush1.msra.mxu0 0.0
  %373 = vmatprep.subr.mxu0 0.0
  %374 = vmatpush1.msra.mxu0 0.0
  %375 = vmatprep.subr.mxu0 0.0
  %376 = vmatpush1.msra.mxu0 0.0
  %377 = vmatprep.subr.mxu0 0.0
  %378 = vmatpush1.msra.mxu0 0.0
  %379 = vmatprep.subr.mxu0 %v353
  %380 = vmatpush1.msra.mxu0 %v352
  %381 = vmatprep.subr.mxu0 %v349
  %382 = vmatpush1.msra.mxu0 %v348
  %383 = vmatprep.subr.mxu0 %v345
  %384 = vmatpush1.msra.mxu0 %v344
  %385 = vmatprep.subr.mxu0 %v341
  %386 = vmatpush1.msra.mxu0 %v340
  %387 = vmatprep.subr.mxu0 %v337
  %388 = vmatpush1.msra.mxu0 %v336
  %389 = vmatprep.subr.mxu0 %v333
  %390 = vmatpush1.msra.mxu0 %v332
  %391 = vmatprep.subr.mxu0 %v329
  %392 = vmatpush1.msra.mxu0 %v328
  %393 = vmatprep.subr.mxu0 %v325
  %394 = vmatpush1.msra.mxu0 %v324
  %395 = vmatprep.subr.mxu0 %v321
  %396 = vmatpush1.msra.mxu0 %v320
  %397 = vmatprep.subr.mxu0 0.0
  %398 = vmatpush2.msra.mxu0 0.0
  %399 = vmatprep.subr.mxu0 0.0
  %400 = vmatpush2.msra.mxu0 0.0
  %401 = vmatprep.subr.mxu0 0.0
  %402 = vmatpush2.msra.mxu0 0.0
  %403 = vmatprep.subr.mxu0 0.0
  %404 = vmatpush2.msra.mxu0 0.0
  %405 = vmatprep.subr.mxu0 0.0
  %406 = vmatpush2.msra.mxu0 0.0
  %407 = vmatprep.subr.mxu0 0.0
  %408 = vmatpush2.msra.mxu0 0.0
  %409 = vmatprep.subr.mxu0 0.0
  %410 = vmatpush2.msra.mxu0 0.0
  %411 = vmatprep.subr.mxu0 0.0
  %412 = vmatpush2.msra.mxu0 0.0
  %413 = vmatprep.subr.mxu0 0.0
  %414 = vmatpush2.msra.mxu0 0.0
  %415 = vmatprep.subr.mxu0 0.0
  %416 = vmatpush2.msra.mxu0 0.0
  %417 = vmatprep.subr.mxu0 0.0
  %418 = vmatpush2.msra.mxu0 0.0
  %419 = vmatprep.subr.mxu0 0.0
  %420 = vmatpush2.msra.mxu0 0.0
  %421 = vmatprep.subr.mxu0 0.0
  %422 = vmatpush2.msra.mxu0 0.0
  %423 = vmatprep.subr.mxu0 0.0
  %424 = vmatpush2.msra.mxu0 0.0
  %425 = vmatprep.subr.mxu0 0.0
  %426 = vmatpush2.msra.mxu0 0.0
  %427 = vmatprep.subr.mxu0 0.0
  %428 = vmatpush2.msra.mxu0 0.0
  %429 = vmatprep.mubr.f32.mxu0 0.0
  %430 = vmatmul.mubr.f32.gmra.mxu0 %v363
  %v431 = vpop.f32.mrf.mxu0
  %v432 = vadd.f32 %v359, %v431
  %v433 = vpop.f32.mrf.mxu0
  %v434 = vadd.f32 %v359, %v433
  %435 = vdwg.mxu0
  %436 = vmatprep.subr.mxu0 0.0
  %437 = vmatpush1.msra.mxu0 0.0
  %438 = vmatprep.subr.mxu0 0.0
  %439 = vmatpush1.msra.mxu0 0.0
  %440 = vmatprep.subr.mxu0 0.0
  %441 = vmatpush1.msra.mxu0 0.0
  %442 = vmatprep.subr.mxu0 0.0
  %443 = vmatpush1.msra.mxu0 0.0
  %444 = vmatprep.subr.mxu0 0.0
  %445 = vmatpush1.msra.mxu0 0.0
  %446 = vmatprep.subr.mxu0 0.0
  %447 = vmatpush1.msra.mxu0 0.0
  %448 = vmatprep.subr.mxu0 0.0
  %449 = vmatpush1.msra.mxu0 0.0
  %450 = vmatprep.subr.mxu0 %v355
  %451 = vmatpush1.msra.mxu0 %v354
  %452 = vmatprep.subr.mxu0 %v351
  %453 = vmatpush1.msra.mxu0 %v350
  %454 = vmatprep.subr.mxu0 %v347
  %455 = vmatpush1.msra.mxu0 %v346
  %456 = vmatprep.subr.mxu0 %v343
  %457 = vmatpush1.msra.mxu0 %v342
  %458 = vmatprep.subr.mxu0 %v339
  %459 = vmatpush1.msra.mxu0 %v338
  %460 = vmatprep.subr.mxu0 %v335
  %461 = vmatpush1.msra.mxu0 %v334
  %462 = vmatprep.subr.mxu0 %v331
  %463 = vmatpush1.msra.mxu0 %v330
  %464 = vmatprep.subr.mxu0 %v327
  %465 = vmatpush1.msra.mxu0 %v326
  %466 = vmatprep.subr.mxu0 %v323
  %467 = vmatpush1.msra.mxu0 %v322
  %468 = vmatprep.subr.mxu0 0.0
  %469 = vmatpush2.msra.mxu0 0.0
  %470 = vmatprep.subr.mxu0 0.0
  %471 = vmatpush2.msra.mxu0 0.0
  %472 = vmatprep.subr.mxu0 0.0
  %473 = vmatpush2.msra.mxu0 0.0
  %474 = vmatprep.subr.mxu0 0.0
  %475 = vmatpush2.msra.mxu0 0.0
  %476 = vmatprep.subr.mxu0 0.0
  %477 = vmatpush2.msra.mxu0 0.0
  %478 = vmatprep.subr.mxu0 0.0
  %479 = vmatpush2.msra.mxu0 0.0
  %480 = vmatprep.subr.mxu0 0.0
  %481 = vmatpush2.msra.mxu0 0.0
  %482 = vmatprep.subr.mxu0 0.0
  %483 = vmatpush2.msra.mxu0 0.0
  %484 = vmatprep.subr.mxu0 0.0
  %485 = vmatpush2.msra.mxu0 0.0
  %486 = vmatprep.subr.mxu0 0.0
  %487 = vmatpush2.msra.mxu0 0.0
  %488 = vmatprep.subr.mxu0 0.0
  %489 = vmatpush2.msra.mxu0 0.0
  %490 = vmatprep.subr.mxu0 0.0
  %491 = vmatpush2.msra.mxu0 0.0
  %492 = vmatprep.subr.mxu0 0.0
  %493 = vmatpush2.msra.mxu0 0.0
  %494 = vmatprep.subr.mxu0 0.0
  %495 = vmatpush2.msra.mxu0 0.0
  %496 = vmatprep.subr.mxu0 0.0
  %497 = vmatpush2.msra.mxu0 0.0
  %498 = vmatprep.subr.mxu0 0.0
  %499 = vmatpush2.msra.mxu0 0.0
  %500 = vmatprep.mubr.f32.mxu0 0.0
  %501 = vmatmul.mubr.f32.gmra.mxu0 %v363
  %v502 = vpop.f32.mrf.mxu0
  %v503 = vadd.f32 %v359, %v502
  %v504 = vpop.f32.mrf.mxu0
  %v505 = vadd.f32 %v359, %v504
  %506 = vdwg.mxu0
  %v507 = vmax.f32 %v432, 0.0
  %v508 = vmax.f32 %v434, 0.0
  %v509 = vmax.f32 %v503, 0.0
  %v510 = vmax.f32 %v505, 0.0
  %511 = vrot.lane.b32.xlu0 %v507, 17
  %v512 = vpop.permute.xlu0 %511
  %513 = vrot.lane.b32.xlu0 %v508, 17
  %v514 = vpop.permute.xlu0 %513
  %515 = vrot.lane.b32.xlu0 %v509, 17
  %v516 = vpop.permute.xlu0 %515
  %517 = vrot.lane.b32.xlu0 %v510, 17
  %v518 = vpop.permute.xlu0 %517
  %v519 = vsel %vm92, %v516, %v518
  %v520 = vsel %vm92, %v514, %v516
  %v521 = vsel %vm92, %v512, %v514
  %v522 = vsel %vm92, %v518, %v512
  %v523 = vsel %vm101, %v522, 0.0
  %v524 = vsel %vm102, %v521, 0.0
  %v525 = vsel %vm103, %v520, 0.0
  %v526 = vsel %vm104, %v519, 0.0
  %527 = vst [vmem:[#allocation2] sm:$0xff] %v523
  %528 = vst [vmem:[#allocation2 + $0x8] sm:$0xff] %v524
  %529 = vst [vmem:[#allocation2 + $0x10] sm:$0xff] %v525
  %530 = vst [vmem:[#allocation2 + $0x18] sm:$0xff] %v526
  %531 = vrot.lane.b32.xlu0 %v507, 16
  %v532 = vpop.permute.xlu0 %531
  %533 = vrot.lane.b32.xlu0 %v508, 16
  %v534 = vpop.permute.xlu0 %533
  %535 = vrot.lane.b32.xlu0 %v509, 16
  %v536 = vpop.permute.xlu0 %535
  %537 = vrot.lane.b32.xlu0 %v510, 16
  %v538 = vpop.permute.xlu0 %537
  %v539 = vsel %vm121, %v536, %v538
  %v540 = vsel %vm121, %v534, %v536
  %v541 = vsel %vm121, %v532, %v534
  %v542 = vsel %vm121, %v538, %v532
  %v543 = vsel %vm130, %v542, 0.0
  %v544 = vsel %vm131, %v541, 0.0
  %v545 = vsel %vm132, %v540, 0.0
  %v546 = vsel %vm133, %v539, 0.0
  %547 = vst [vmem:[#allocation2 + $0x20] sm:$0xff] %v543
  %548 = vst [vmem:[#allocation2 + $0x28] sm:$0xff] %v544
  %549 = vst [vmem:[#allocation2 + $0x30] sm:$0xff] %v545
  %550 = vst [vmem:[#allocation2 + $0x38] sm:$0xff] %v546
  %551 = vrot.lane.b32.xlu0 %v507, 15
  %v552 = vpop.permute.xlu0 %551
  %553 = vrot.lane.b32.xlu0 %v508, 15
  %v554 = vpop.permute.xlu0 %553
  %555 = vrot.lane.b32.xlu0 %v509, 15
  %v556 = vpop.permute.xlu0 %555
  %557 = vrot.lane.b32.xlu0 %v510, 15
  %v558 = vpop.permute.xlu0 %557
  %v559 = vsel %vm150, %v556, %v558
  %v560 = vsel %vm150, %v554, %v556
  %v561 = vsel %vm150, %v552, %v554
  %v562 = vsel %vm150, %v558, %v552
  %v563 = vsel %vm159, %v562, 0.0
  %v564 = vsel %vm160, %v561, 0.0
  %v565 = vsel %vm161, %v560, 0.0
  %v566 = vsel %vm162, %v559, 0.0
  %567 = vst [vmem:[#allocation2 + $0x40] sm:$0xff] %v563
  %568 = vst [vmem:[#allocation2 + $0x48] sm:$0xff] %v564
  %569 = vst [vmem:[#allocation2 + $0x50] sm:$0xff] %v565
  %570 = vst [vmem:[#allocation2 + $0x58] sm:$0xff] %v566
  %571 = vrot.lane.b32.xlu0 %v507, 1
  %v572 = vpop.permute.xlu0 %571
  %573 = vrot.lane.b32.xlu0 %v508, 1
  %v574 = vpop.permute.xlu0 %573
  %575 = vrot.lane.b32.xlu0 %v509, 1
  %v576 = vpop.permute.xlu0 %575
  %577 = vrot.lane.b32.xlu0 %v510, 1
  %v578 = vpop.permute.xlu0 %577
  %v579 = vsel %vm179, %v576, %v578
  %v580 = vsel %vm179, %v574, %v576
  %v581 = vsel %vm179, %v572, %v574
  %v582 = vsel %vm179, %v578, %v572
  %v583 = vsel %vm188, %v582, 0.0
  %v584 = vsel %vm189, %v581, 0.0
  %v585 = vsel %vm190, %v580, 0.0
  %v586 = vsel %vm191, %v579, 0.0
  %587 = vst [vmem:[#allocation2 + $0x60] sm:$0xff] %v583
  %588 = vst [vmem:[#allocation2 + $0x68] sm:$0xff] %v584
  %589 = vst [vmem:[#allocation2 + $0x70] sm:$0xff] %v585
  %590 = vst [vmem:[#allocation2 + $0x78] sm:$0xff] %v586
  %591 = vst [vmem:[#allocation2 + $0x80] sm:$0xff] %v507
  %592 = vst [vmem:[#allocation2 + $0x88] sm:$0xff] %v508
  %593 = vst [vmem:[#allocation2 + $0x90] sm:$0xff] %v509
  %594 = vst [vmem:[#allocation2 + $0x98] sm:$0xff] %v510
  %595 = vrot.lane.b32.xlu0 %v507, 127
  %v596 = vpop.permute.xlu0 %595
  %597 = vrot.lane.b32.xlu0 %v508, 127
  %v598 = vpop.permute.xlu0 %597
  %599 = vrot.lane.b32.xlu0 %v509, 127
  %v600 = vpop.permute.xlu0 %599
  %601 = vrot.lane.b32.xlu0 %v510, 127
  %v602 = vpop.permute.xlu0 %601
  %v603 = vsel %vm212, %v600, %v602
  %v604 = vsel %vm212, %v598, %v600
  %v605 = vsel %vm212, %v596, %v598
  %v606 = vsel %vm212, %v602, %v596
  %v607 = vsel %vm221, %v605, 0.0
  %v608 = vsel %vm222, %v604, 0.0
  %v609 = vsel %vm223, %v603, 0.0
  %v610 = vsel %vm224, %v606, 0.0
  %611 = vst [vmem:[#allocation2 + $0xa0] sm:$0xff] %v607
  %612 = vst [vmem:[#allocation2 + $0xa8] sm:$0xff] %v608
  %613 = vst [vmem:[#allocation2 + $0xb0] sm:$0xff] %v609
  %614 = vst [vmem:[#allocation2 + $0xb8] sm:$0xff] %v610
  %615 = vrot.lane.b32.xlu0 %v507, 113
  %v616 = vpop.permute.xlu0 %615
  %617 = vrot.lane.b32.xlu0 %v508, 113
  %v618 = vpop.permute.xlu0 %617
  %619 = vrot.lane.b32.xlu0 %v509, 113
  %v620 = vpop.permute.xlu0 %619
  %621 = vrot.lane.b32.xlu0 %v510, 113
  %v622 = vpop.permute.xlu0 %621
  %v623 = vsel %vm241, %v620, %v622
  %v624 = vsel %vm241, %v618, %v620
  %v625 = vsel %vm241, %v616, %v618
  %v626 = vsel %vm241, %v622, %v616
  %v627 = vsel %vm250, %v625, 0.0
  %v628 = vsel %vm251, %v624, 0.0
  %v629 = vsel %vm252, %v623, 0.0
  %v630 = vsel %vm253, %v626, 0.0
  %631 = vst [vmem:[#allocation2 + $0xc0] sm:$0xff] %v627
  %632 = vst [vmem:[#allocation2 + $0xc8] sm:$0xff] %v628
  %633 = vst [vmem:[#allocation2 + $0xd0] sm:$0xff] %v629
  %634 = vst [vmem:[#allocation2 + $0xd8] sm:$0xff] %v630
  %635 = vrot.lane.b32.xlu0 %v507, 112
  %v636 = vpop.permute.xlu0 %635
  %637 = vrot.lane.b32.xlu0 %v508, 112
  %v638 = vpop.permute.xlu0 %637
  %639 = vrot.lane.b32.xlu0 %v509, 112
  %v640 = vpop.permute.xlu0 %639
  %641 = vrot.lane.b32.xlu0 %v510, 112
  %v642 = vpop.permute.xlu0 %641
  %v643 = vsel %vm270, %v640, %v642
  %v644 = vsel %vm270, %v638, %v640
  %v645 = vsel %vm270, %v636, %v638
  %v646 = vsel %vm270, %v642, %v636
  %v647 = vsel %vm279, %v645, 0.0
  %v648 = vsel %vm280, %v644, 0.0
  %v649 = vsel %vm281, %v643, 0.0
  %v650 = vsel %vm282, %v646, 0.0
  %651 = vst [vmem:[#allocation2 + $0xe0] sm:$0xff] %v647
  %652 = vst [vmem:[#allocation2 + $0xe8] sm:$0xff] %v648
  %653 = vst [vmem:[#allocation2 + $0xf0] sm:$0xff] %v649
  %654 = vst [vmem:[#allocation2 + $0xf8] sm:$0xff] %v650
  %655 = vrot.lane.b32.xlu0 %v507, 111
  %v656 = vpop.permute.xlu0 %655
  %657 = vrot.lane.b32.xlu0 %v508, 111
  %v658 = vpop.permute.xlu0 %657
  %659 = vrot.lane.b32.xlu0 %v509, 111
  %v660 = vpop.permute.xlu0 %659
  %661 = vrot.lane.b32.xlu0 %v510, 111
  %v662 = vpop.permute.xlu0 %661
  %v663 = vsel %vm299, %v660, %v662
  %v664 = vsel %vm299, %v658, %v660
  %v665 = vsel %vm299, %v656, %v658
  %v666 = vsel %vm299, %v662, %v656
  %v667 = vsel %vm308, %v665, 0.0
  %v668 = vsel %vm309, %v664, 0.0
  %v669 = vsel %vm310, %v663, 0.0
  %v670 = vsel %vm311, %v666, 0.0
  %671 = vst [vmem:[#allocation2 + $0x100] sm:$0xff] %v667
  %672 = vst [vmem:[#allocation2 + $0x108] sm:$0xff] %v668
  %673 = vst [vmem:[#allocation2 + $0x110] sm:$0xff] %v669
  %674 = vst [vmem:[#allocation2 + $0x118] sm:$0xff] %v670
  %v675 = vld [vmem:[#allocation2] sm:$0xff]
  %v676 = vld [vmem:[#allocation2 + $0x8] sm:$0xff]
  %v677 = vld [vmem:[#allocation2 + $0x10] sm:$0xff]
  %v678 = vld [vmem:[#allocation2 + $0x18] sm:$0xff]
  %v679 = vld [vmem:[#allocation2 + $0x20] sm:$0xff]
  %v680 = vld [vmem:[#allocation2 + $0x28] sm:$0xff]
  %v681 = vld [vmem:[#allocation2 + $0x30] sm:$0xff]
  %v682 = vld [vmem:[#allocation2 + $0x38] sm:$0xff]
  %v683 = vld [vmem:[#allocation2 + $0x40] sm:$0xff]
  %v684 = vld [vmem:[#allocation2 + $0x48] sm:$0xff]
  %v685 = vld [vmem:[#allocation2 + $0x50] sm:$0xff]
  %v686 = vld [vmem:[#allocation2 + $0x58] sm:$0xff]
  %v687 = vld [vmem:[#allocation2 + $0x60] sm:$0xff]
  %v688 = vld [vmem:[#allocation2 + $0x68] sm:$0xff]
  %v689 = vld [vmem:[#allocation2 + $0x70] sm:$0xff]
  %v690 = vld [vmem:[#allocation2 + $0x78] sm:$0xff]
  %v691 = vld [vmem:[#allocation2 + $0x80] sm:$0xff]
  %v692 = vld [vmem:[#allocation2 + $0x88] sm:$0xff]
  %v693 = vld [vmem:[#allocation2 + $0x90] sm:$0xff]
  %v694 = vld [vmem:[#allocation2 + $0x98] sm:$0xff]
  %v695 = vld [vmem:[#allocation2 + $0xa0] sm:$0xff]
  %v696 = vld [vmem:[#allocation2 + $0xa8] sm:$0xff]
  %v697 = vld [vmem:[#allocation2 + $0xb0] sm:$0xff]
  %v698 = vld [vmem:[#allocation2 + $0xb8] sm:$0xff]
  %v699 = vld [vmem:[#allocation2 + $0xc0] sm:$0xff]
  %v700 = vld [vmem:[#allocation2 + $0xc8] sm:$0xff]
  %v701 = vld [vmem:[#allocation2 + $0xd0] sm:$0xff]
  %v702 = vld [vmem:[#allocation2 + $0xd8] sm:$0xff]
  %v703 = vld [vmem:[#allocation2 + $0xe0] sm:$0xff]
  %v704 = vld [vmem:[#allocation2 + $0xe8] sm:$0xff]
  %v705 = vld [vmem:[#allocation2 + $0xf0] sm:$0xff]
  %v706 = vld [vmem:[#allocation2 + $0xf8] sm:$0xff]
  %v707 = vld [vmem:[#allocation2 + $0x100] sm:$0xff]
  %v708 = vld [vmem:[#allocation2 + $0x108] sm:$0xff]
  %v709 = vld [vmem:[#allocation2 + $0x110] sm:$0xff]
  %v710 = vld [vmem:[#allocation2 + $0x118] sm:$0xff]
  %712 = vset.pattern.permute.xlu0 0
  %713 = vperm.xlu0 %712, %v71
  %v714 = vpop.permute.xlu0 %713
  %v717 = vsel %vm361, %v69, 0
  %719 = vmatprep.subr.mxu0 0.0
  %720 = vmatpush1.msra.mxu0 0.0
  %721 = vmatprep.subr.mxu0 0.0
  %722 = vmatpush1.msra.mxu0 0.0
  %723 = vmatprep.subr.mxu0 0.0
  %724 = vmatpush1.msra.mxu0 0.0
  %725 = vmatprep.subr.mxu0 0.0
  %726 = vmatpush1.msra.mxu0 0.0
  %727 = vmatprep.subr.mxu0 0.0
  %728 = vmatpush1.msra.mxu0 0.0
  %729 = vmatprep.subr.mxu0 0.0
  %730 = vmatpush1.msra.mxu0 0.0
  %731 = vmatprep.subr.mxu0 0.0
  %732 = vmatpush1.msra.mxu0 0.0
  %733 = vmatprep.subr.mxu0 %v708
  %734 = vmatpush1.msra.mxu0 %v707
  %735 = vmatprep.subr.mxu0 %v704
  %736 = vmatpush1.msra.mxu0 %v703
  %737 = vmatprep.subr.mxu0 %v700
  %738 = vmatpush1.msra.mxu0 %v699
  %739 = vmatprep.subr.mxu0 %v696
  %740 = vmatpush1.msra.mxu0 %v695
  %741 = vmatprep.subr.mxu0 %v692
  %742 = vmatpush1.msra.mxu0 %v691
  %743 = vmatprep.subr.mxu0 %v688
  %744 = vmatpush1.msra.mxu0 %v687
  %745 = vmatprep.subr.mxu0 %v684
  %746 = vmatpush1.msra.mxu0 %v683
  %747 = vmatprep.subr.mxu0 %v680
  %748 = vmatpush1.msra.mxu0 %v679
  %749 = vmatprep.subr.mxu0 %v676
  %750 = vmatpush1.msra.mxu0 %v675
  %751 = vmatprep.subr.mxu0 0.0
  %752 = vmatpush2.msra.mxu0 0.0
  %753 = vmatprep.subr.mxu0 0.0
  %754 = vmatpush2.msra.mxu0 0.0
  %755 = vmatprep.subr.mxu0 0.0
  %756 = vmatpush2.msra.mxu0 0.0
  %757 = vmatprep.subr.mxu0 0.0
  %758 = vmatpush2.msra.mxu0 0.0
  %759 = vmatprep.subr.mxu0 0.0
  %760 = vmatpush2.msra.mxu0 0.0
  %761 = vmatprep.subr.mxu0 0.0
  %762 = vmatpush2.msra.mxu0 0.0
  %763 = vmatprep.subr.mxu0 0.0
  %764 = vmatpush2.msra.mxu0 0.0
  %765 = vmatprep.subr.mxu0 0.0
  %766 = vmatpush2.msra.mxu0 0.0
  %767 = vmatprep.subr.mxu0 0.0
  %768 = vmatpush2.msra.mxu0 0.0
  %769 = vmatprep.subr.mxu0 0.0
  %770 = vmatpush2.msra.mxu0 0.0
  %771 = vmatprep.subr.mxu0 0.0
  %772 = vmatpush2.msra.mxu0 0.0
  %773 = vmatprep.subr.mxu0 0.0
  %774 = vmatpush2.msra.mxu0 0.0
  %775 = vmatprep.subr.mxu0 0.0
  %776 = vmatpush2.msra.mxu0 0.0
  %777 = vmatprep.subr.mxu0 0.0
  %778 = vmatpush2.msra.mxu0 0.0
  %779 = vmatprep.subr.mxu0 0.0
  %780 = vmatpush2.msra.mxu0 0.0
  %781 = vmatprep.subr.mxu0 0.0
  %782 = vmatpush2.msra.mxu0 0.0
  %783 = vmatprep.mubr.f32.mxu0 0.0
  %784 = vmatmul.mubr.f32.gmra.mxu0 %v717
  %v785 = vpop.f32.mrf.mxu0
  %v786 = vadd.f32 %v714, %v785
  %v787 = vpop.f32.mrf.mxu0
  %v788 = vadd.f32 %v714, %v787
  %789 = vdwg.mxu0
  %790 = vmatprep.subr.mxu0 0.0
  %791 = vmatpush1.msra.mxu0 0.0
  %792 = vmatprep.subr.mxu0 0.0
  %793 = vmatpush1.msra.mxu0 0.0
  %794 = vmatprep.subr.mxu0 0.0
  %795 = vmatpush1.msra.mxu0 0.0
  %796 = vmatprep.subr.mxu0 0.0
  %797 = vmatpush1.msra.mxu0 0.0
  %798 = vmatprep.subr.mxu0 0.0
  %799 = vmatpush1.msra.mxu0 0.0
  %800 = vmatprep.subr.mxu0 0.0
  %801 = vmatpush1.msra.mxu0 0.0
  %802 = vmatprep.subr.mxu0 0.0
  %803 = vmatpush1.msra.mxu0 0.0
  %804 = vmatprep.subr.mxu0 %v710
  %805 = vmatpush1.msra.mxu0 %v709
  %806 = vmatprep.subr.mxu0 %v706
  %807 = vmatpush1.msra.mxu0 %v705
  %808 = vmatprep.subr.mxu0 %v702
  %809 = vmatpush1.msra.mxu0 %v701
  %810 = vmatprep.subr.mxu0 %v698
  %811 = vmatpush1.msra.mxu0 %v697
  %812 = vmatprep.subr.mxu0 %v694
  %813 = vmatpush1.msra.mxu0 %v693
  %814 = vmatprep.subr.mxu0 %v690
  %815 = vmatpush1.msra.mxu0 %v689
  %816 = vmatprep.subr.mxu0 %v686
  %817 = vmatpush1.msra.mxu0 %v685
  %818 = vmatprep.subr.mxu0 %v682
  %819 = vmatpush1.msra.mxu0 %v681
  %820 = vmatprep.subr.mxu0 %v678
  %821 = vmatpush1.msra.mxu0 %v677
  %822 = vmatprep.subr.mxu0 0.0
  %823 = vmatpush2.msra.mxu0 0.0
  %824 = vmatprep.subr.mxu0 0.0
  %825 = vmatpush2.msra.mxu0 0.0
  %826 = vmatprep.subr.mxu0 0.0
  %827 = vmatpush2.msra.mxu0 0.0
  %828 = vmatprep.subr.mxu0 0.0
  %829 = vmatpush2.msra.mxu0 0.0
  %830 = vmatprep.subr.mxu0 0.0
  %831 = vmatpush2.msra.mxu0 0.0
  %832 = vmatprep.subr.mxu0 0.0
  %833 = vmatpush2.msra.mxu0 0.0
  %834 = vmatprep.subr.mxu0 0.0
  %835 = vmatpush2.msra.mxu0 0.0
  %836 = vmatprep.subr.mxu0 0.0
  %837 = vmatpush2.msra.mxu0 0.0
  %838 = vmatprep.subr.mxu0 0.0
  %839 = vmatpush2.msra.mxu0 0.0
  %840 = vmatprep.subr.mxu0 0.0
  %841 = vmatpush2.msra.mxu0 0.0
  %842 = vmatprep.subr.mxu0 0.0
  %843 = vmatpush2.msra.mxu0 0.0
  %844 = vmatprep.subr.mxu0 0.0
  %845 = vmatpush2.msra.mxu0 0.0
  %846 = vmatprep.subr.mxu0 0.0
  %847 = vmatpush2.msra.mxu0 0.0
  %848 = vmatprep.subr.mxu0 0.0
  %849 = vmatpush2.msra.mxu0 0.0
  %850 = vmatprep.subr.mxu0 0.0
  %851 = vmatpush2.msra.mxu0 0.0
  %852 = vmatprep.subr.mxu0 0.0
  %853 = vmatpush2.msra.mxu0 0.0
  %854 = vmatprep.mubr.f32.mxu0 0.0
  %855 = vmatmul.mubr.f32.gmra.mxu0 %v717
  %v856 = vpop.f32.mrf.mxu0
  %v857 = vadd.f32 %v714, %v856
  %v858 = vpop.f32.mrf.mxu0
  %v859 = vadd.f32 %v714, %v858
  %860 = vdwg.mxu0
  %v861 = vmax.f32 %v786, 0.0
  %v862 = vmax.f32 %v788, 0.0
  %v863 = vmax.f32 %v857, 0.0
  %v864 = vmax.f32 %v859, 0.0
  %865 = vst [vmem:[%s6] sm:$0xff] %v861
  %866 = vst [vmem:[%s6 + $0x8] sm:$0xff] %v862
  %867 = vst [vmem:[%s6 + $0x10] sm:$0xff] %v863
  %868 = vst [vmem:[%s6 + $0x18] sm:$0xff] %v864
  // Predicated region
  $region26: #{query_module_forward.1} parent=0 // pred_check
    _
  $region27: #{query_module_forward.1} parent=0 // pred_check_branch
    %870 = sbr.rel (0) target = $region29
  $region28: #{query_module_forward.1} parent=0 // pred_region
    _
  $region29: #{query_module_forward.1} parent=0 // pred_fallthru
    _
  // Predicated region
  $region30: #{query_module_forward.1} parent=0 // pred_check
    _
  $region31: #{query_module_forward.1} parent=0 // pred_check_branch
    %872 = sbr.rel (0) target = $region33
  $region32: #{query_module_forward.1} parent=0 // pred_region
    _
  $region33: #{query_module_forward.1} parent=0 // pred_fallthru
    _

</llo_original>
